<compile_context>
chip_gen: v7x
topology: tpu7x:2x2x1
jax: 0.10.0
libtpu: 0.0.40
codegen_flags: <defaults>
</compile_context>

<pallas_src>
import functools

import jax
import jax.numpy as jnp
from jax.experimental import pallas as pl
from jax.experimental.pallas import tpu as pltpu


# -----------------------------------------------------------------------------
# Fast path: small table lives in VMEM -> one-hot matmul gather on the MXU.
# -----------------------------------------------------------------------------
def _embed_onehot_kernel(ids_ref, w_ref, out_ref, *, vocab_size: int):
    """ids_ref: VMEM (tok_block, 1) int32; w_ref: VMEM (V, D); out: (tok_block, D)."""
    tok_block = ids_ref.shape[0]
    col = jax.lax.broadcasted_iota(jnp.int32, (tok_block, vocab_size), 1)
    onehot = (ids_ref[...] == col).astype(w_ref.dtype)
    prec = (jax.lax.Precision.HIGHEST
            if w_ref.dtype == jnp.float32 else jax.lax.Precision.DEFAULT)
    gathered = jnp.dot(onehot, w_ref[...], precision=prec,
                       preferred_element_type=jnp.float32)
    out_ref[...] = gathered.astype(out_ref.dtype)


# -----------------------------------------------------------------------------
# Large-vocab path: HBM-resident table, manual per-row DMA gather.
# -----------------------------------------------------------------------------
def _embed_gather_kernel(ids_ref, w_hbm, out_ref, sem, *,
                         tok_block: int, row_unroll: int):
    """Gather tok_block embedding rows from HBM via per-row DMAs.

    ids_ref : SMEM (n_pad,) int32    scalar-prefetched token ids
    w_hbm   : HBM  (V, D)            embedding table (never VMEM resident)
    out_ref : VMEM (tok_block, D)    auto-pipelined output block
    sem     : DMA semaphore array, shape (1,)
    """
    blk = pl.program_id(0)
    base = pl.multiple_of(blk * tok_block, tok_block)

    # Issue all row DMAs first (8x unrolled so id loads, address math and
    # descriptor pushes pipeline through the vector-misc slot), then drain
    # with a single bulk wait sized to the whole tile.
    n_groups = tok_block // row_unroll

    @pl.loop(0, n_groups)
    def _issue(g):
        g0 = pl.multiple_of(g * row_unroll, row_unroll)
        for u in range(row_unroll):              # static unroll
            t = g0 + u
            tok = ids_ref[base + t]
            pltpu.make_async_copy(
                w_hbm.at[pl.ds(tok, 1), :],
                out_ref.at[pl.ds(t, 1), :],
                sem.at[0],
            ).start()

    # Bulk drain: waits for tok_block * D * itemsize bytes, which equals the
    # sum of all row copies issued above (src/dst dtypes match by construction).
    pltpu.make_async_copy(
        w_hbm.at[pl.ds(0, tok_block), :],
        out_ref,
        sem.at[0],
    ).wait()
    # TODO(synk): double-buffer the gather across grid steps (prefetch block
    # i+1's rows into a (2, tok_block, D) scratch) to hide HBM fill latency.


def token_embedding_forward(ids: jax.Array, weight: jax.Array,
                            style_id=None, *,
                            dropout_p: float = 0.0,
                            tok_block: int = 256,
                            vmem_table_limit_bytes: int = 4 * 1024 * 1024
                            ) -> jax.Array:
    """Pallas equivalent of TokenEmbedding.forward (dropout p=0 -> identity)."""
    del style_id  # unused by the reference module's forward
    if dropout_p != 0.0:
        # TODO(synk): dropout masking via pltpu.prng_seed/prng_random_bits for p > 0.
        raise NotImplementedError("only dropout_p == 0.0 (the module default)")

    B, S = ids.shape
    V, D = weight.shape
    n_tok = B * S
    itemsize = jnp.dtype(weight.dtype).itemsize

    # Cap the block so double-buffered output tiles stay <= ~16 MiB (v7x safe).
    vmem_cap_rows = max(8, (16 * 1024 * 1024) // max(1, 2 * D * itemsize))
    tok_block = int(min(tok_block, vmem_cap_rows, pl.cdiv(n_tok, 8) * 8))
    tok_block = max(8, (tok_block // 8) * 8)     # sublane-aligned

    n_blocks = pl.cdiv(n_tok, tok_block)
    n_pad = n_blocks * tok_block

    flat_ids = jnp.clip(ids.reshape(n_tok).astype(jnp.int32), 0, V - 1)
    if n_pad != n_tok:
        # Only the (tiny, int32) id vector is padded; the OUTPUT stays (n_tok, D)
        # with a partial final block -- no pad-then-slice pass over HBM.
        flat_ids = jnp.pad(flat_ids, (0, n_pad - n_tok))

    out_shape = jax.ShapeDtypeStruct((n_tok, D), weight.dtype)

    if V * D * itemsize <= vmem_table_limit_bytes:
        # ---------------- VMEM-resident fast path (one-hot matmul) ----------
        ids_2d = flat_ids.reshape(n_pad, 1)
        out_flat = pl.pallas_call(
            functools.partial(_embed_onehot_kernel, vocab_size=V),
            out_shape=out_shape,
            grid=(n_blocks,),
            in_specs=[
                pl.BlockSpec((tok_block, 1), lambda i: (i, 0)),
                pl.BlockSpec((V, D), lambda i: (0, 0)),  # table resident in VMEM
            ],
            out_specs=pl.BlockSpec((tok_block, D), lambda i: (i, 0)),
            compiler_params=pltpu.CompilerParams(
                dimension_semantics=("parallel",)),
            cost_estimate=pl.CostEstimate(
                flops=int(2 * n_pad * V * D),
                transcendentals=0,
                bytes_accessed=int((V * D + n_tok * D) * itemsize + n_pad * 4)),
        )(ids_2d, weight)
    else:
        # ---------------- HBM-resident DMA gather path -----------------------
        # TODO(synk): for very large B*S pass ids as a blocked SMEM window
        # (pl.BlockSpec((tok_block,), lambda i: (i,), memory_space=pltpu.SMEM))
        # instead of scalar-prefetching the whole id vector.
        kernel = functools.partial(_embed_gather_kernel,
                                   tok_block=tok_block, row_unroll=8)
        out_flat = pl.pallas_call(
            kernel,
            out_shape=out_shape,
            grid_spec=pltpu.PrefetchScalarGridSpec(
                num_scalar_prefetch=1,               # flat_ids -> SMEM scalars
                grid=(n_blocks,),
                in_specs=[pl.BlockSpec(memory_space=pl.ANY)],   # table stays in HBM
                out_specs=pl.BlockSpec((tok_block, D), lambda i, ids: (i, 0)),
                scratch_shapes=[pltpu.SemaphoreType.DMA((1,))],
            ),
            compiler_params=pltpu.CompilerParams(
                dimension_semantics=("parallel",)),
            cost_estimate=pl.CostEstimate(
                flops=0, transcendentals=0,
                bytes_accessed=int(2 * n_tok * D * itemsize)),
        )(flat_ids, weight)

    # TODO(synk): for D < 128 a lane-dense packing (128 // D tokens per row)
    # would make output stores unmasked; small-D configs route through the
    # VMEM fast path instead.
    return out_flat.reshape(B, S, D)


if __name__ == "__main__":
    key = jax.random.PRNGKey(0)
    k_w, k_x, k_w2, k_x2 = jax.random.split(key, 4)

    # Spec-consistent small config: dim_model=32, vocab_size=64, batch=2, seq=8.
    B, S, dim_model, vocab_size = 2, 8, 32, 64
    weight = jax.random.normal(k_w, (vocab_size, dim_model), dtype=jnp.float32)
    x = jax.random.randint(k_x, (B, S), 0, vocab_size, dtype=jnp.int32)

    out = jax.block_until_ready(token_embedding_forward(x, weight))
    ref = weight[x]                      # dropout(p=0) is the identity
    assert out.shape == (B, S, dim_model), out.shape
    assert jnp.allclose(out, ref), "fast-path mismatch vs reference lookup"

    # Also exercise the HBM DMA-gather path (forced) with a ragged final block.
    B2, S2, D2, V2 = 2, 24, 128, 512
    weight2 = jax.random.normal(k_w2, (V2, D2), dtype=jnp.float32)
    x2 = jax.random.randint(k_x2, (B2, S2), 0, V2, dtype=jnp.int32)
    out2 = jax.block_until_ready(
        token_embedding_forward(x2, weight2, tok_block=32,
                                vmem_table_limit_bytes=0))
    assert out2.shape == (B2, S2, D2), out2.shape
    assert jnp.allclose(out2, weight2[x2]), "gather-path mismatch vs reference"

    print("KERNEL_OK")
</pallas_src>

<mosaic_0001>
module attributes {stable_mosaic.version = 11 : i64} {
  func.func @_embed_onehot_kernel(%arg0: i32, %arg1: memref<16x1xi32, #tpu.memory_space<vmem>>, %arg2: memref<64x32xf32, #tpu.memory_space<vmem>>, %arg3: memref<16x32xf32, #tpu.memory_space<vmem>>) attributes {dimension_semantics = [#tpu.dimension_semantics<parallel>], iteration_bounds = array<i64: 1>, scalar_prefetch = 0 : i64, scratch_operands = 0 : i64, tpu.core_type = #tpu.core_type<tc>, window_params = [{transform_indices = @transform_0, window_bounds = array<i64: 16, 1>}, {pipeline_mode = #tpu.pipeline_mode<synchronous>, transform_indices = @transform_1, window_bounds = array<i64: 64, 32>}, {transform_indices = @transform_2, window_bounds = array<i64: 16, 32>}]} {
    %0 = tpu.iota {dimensions = array<i32: 1>} : vector<16x64xi32>
    %c0 = arith.constant 0 : index
    %c0_0 = arith.constant 0 : index
    %1 = vector.load %arg1[%c0, %c0_0] : memref<16x1xi32, #tpu.memory_space<vmem>>, vector<16x1xi32>
    %2 = vector.broadcast %1 : vector<16x1xi32> to vector<16x64xi32>
    %3 = arith.cmpi eq, %2, %0 : vector<16x64xi32>
    %4 = arith.extui %3 : vector<16x64xi1> to vector<16x64xi32>
    %5 = arith.sitofp %4 : vector<16x64xi32> to vector<16x64xf32>
    %c0_1 = arith.constant 0 : index
    %c0_2 = arith.constant 0 : index
    %6 = vector.load %arg2[%c0_1, %c0_2] : memref<64x32xf32, #tpu.memory_space<vmem>>, vector<64x32xf32>
    %cst = arith.constant dense<0.000000e+00> : vector<16x32xf32>
    %7 = tpu.matmul %5, %6, %cst {dimension_numbers = #tpu.dot_dimension_numbers<[1], [0], [0], [1], [0, 0, 1, 1], [], []>, precision = #tpu.contract_precision<fp32>} : vector<16x64xf32>, vector<64x32xf32>, vector<16x32xf32> -> vector<16x32xf32>
    %c0_3 = arith.constant 0 : index
    %c0_4 = arith.constant 0 : index
    %8 = vector.load %arg3[%c0_3, %c0_4] : memref<16x32xf32, #tpu.memory_space<vmem>>, vector<16x32xf32>
    tpu.vector_store %arg3[%c0_3, %c0_4], %7 {strides = array<i32>} : memref<16x32xf32, #tpu.memory_space<vmem>>, vector<16x32xf32>,
    return
  }
  func.func @transform_0(%arg0: i32) -> (i32, i32) {
    %c0_i32 = arith.constant 0 : i32
    %c0_i32_0 = arith.constant 0 : i32
    return %arg0, %c0_i32 : i32, i32
  }
  func.func @transform_1(%arg0: i32) -> (i32, i32) {
    %c0_i32 = arith.constant 0 : i32
    %c0_i32_0 = arith.constant 0 : i32
    %c0_i32_1 = arith.constant 0 : i32
    return %c0_i32, %c0_i32_0 : i32, i32
  }
  func.func @transform_2(%arg0: i32) -> (i32, i32) {
    %c0_i32 = arith.constant 0 : i32
    %c0_i32_0 = arith.constant 0 : i32
    return %arg0, %c0_i32 : i32, i32
  }
}

</mosaic_0001>

<llo_original>
// kernel: tpu_custom_call.1
$region0: #{tpu_custom_call.1}
  #allocation0 [shape = 'u32[]', space=smem, size = 0x4, offset = 0x4, fixed_abs, tag = 'smem constant byte address 0x4 - core index']
  #allocation1 [shape = 'u32[144,128]{1,0:T(1,128)}', space=vmem, size = 0x12000, scoped, tag = 'internal scratch']
  %s0 = inlined_call_operand.vmem [shape: s32[16,1], index: 0, kind: input, shape index: {}]
  %s1 = inlined_call_operand.vmem [shape: f32[64,32], index: 1, kind: input, shape index: {}]
  %s2 = inlined_call_operand.hbm [shape: f32[16,32], index: 2, kind: output, shape index: {}]
  %s3 = sld [smem:[#allocation0]]
  $region18: #{tpu_custom_call.1} parent=0
    _
  %s5 = ssub.s32 1, %s3
  %s6 = scalar_select 0, %s5, %s3
  $region1: #{tpu_custom_call.1} parent=0
    #allocation2 [shape = 'u8[8192]{0}', space=vmem, size = 0x2000, scoped, tag = 'output window, operand 0, single buffered']
    #allocation3 [shape = 's32[1]{0}', space=sflag, size = 0x4, scoped, tag = 'scoped memory for tpu_custom_call.1']
    %7 = vsyncpa [#allocation3], 0
    // Predicated region
    $region2: #{tpu_custom_call.1} parent=1 // pred_check
      _
    $region3: #{tpu_custom_call.1} parent=1 // pred_check_branch
      %9 = sbr.rel (0) target = $region5
    $region4: #{tpu_custom_call.1} parent=1 // pred_region
      _
    $region5: #{tpu_custom_call.1} parent=1 // pred_fallthru
      _
    // Predicated region
    $region6: #{tpu_custom_call.1} parent=1 // pred_check
      _
    $region7: #{tpu_custom_call.1} parent=1 // pred_check_branch
      %11 = sbr.rel (0) target = $region9
    $region8: #{tpu_custom_call.1} parent=1 // pred_region
      _
    $region9: #{tpu_custom_call.1} parent=1 // pred_fallthru
      _
    %v12 = vlaneseq
    %v13 = vand.u32 %v12, 127
    %v14 = vld [vmem:[%s0] sm:$0xff]
    %v15 = vld [vmem:[%s0 + $0x8] sm:$0xff]
    %16 = vset.pattern.permute.xlu0 0
    %17 = vperm.xlu0 %16, %v14
    %v18 = vpop.permute.xlu0 %17
    %19 = vset.pattern.permute.xlu0 0
    %20 = vperm.xlu0 %19, %v15
    %v21 = vpop.permute.xlu0 %20
    %vm22 = vcmp.eq.s32.totalorder %v18, %v13
    %vm23 = vcmp.eq.s32.totalorder %v21, %v13
    %v24 = vsel %vm22, 1, 0
    %v25 = vsel %vm23, 1, 0
    %v26 = vcvt.s32.f32 %v24
    %v27 = vcvt.s32.f32 %v25
    %v28 = vld [vmem:[%s1] sm:$0xff]
    %v29 = vld [vmem:[%s1 + $0x8] sm:$0xff]
    %v30 = vld [vmem:[%s1 + $0x10] sm:$0xff]
    %v31 = vld [vmem:[%s1 + $0x18] sm:$0xff]
    %v32 = vld [vmem:[%s1 + $0x20] sm:$0xff]
    %v33 = vld [vmem:[%s1 + $0x28] sm:$0xff]
    %v34 = vld [vmem:[%s1 + $0x30] sm:$0xff]
    %v35 = vld [vmem:[%s1 + $0x38] sm:$0xff]
    %vm36 = vcmask 523264
    %v38 = vsel %vm36, %v26, 0
    %v41 = vsel %vm36, %v27, 0
    %43 = vmatprep.subr.mxu0 0.0
    %v44 = vand.u32 %v28, 4294901760
    %45 = vmatpush1.msra.mxu0 %v44
    %46 = vmatprep.subr.mxu0 0.0
    %v47 = vand.u32 %v29, 4294901760
    %48 = vmatpush1.msra.mxu0 %v47
    %49 = vmatprep.subr.mxu0 0.0
    %v50 = vand.u32 %v30, 4294901760
    %51 = vmatpush1.msra.mxu0 %v50
    %52 = vmatprep.subr.mxu0 0.0
    %v53 = vand.u32 %v31, 4294901760
    %54 = vmatpush1.msra.mxu0 %v53
    %55 = vmatprep.subr.mxu0 0.0
    %v56 = vand.u32 %v32, 4294901760
    %57 = vmatpush1.msra.mxu0 %v56
    %58 = vmatprep.subr.mxu0 0.0
    %v59 = vand.u32 %v33, 4294901760
    %60 = vmatpush1.msra.mxu0 %v59
    %61 = vmatprep.subr.mxu0 0.0
    %v62 = vand.u32 %v34, 4294901760
    %63 = vmatpush1.msra.mxu0 %v62
    %64 = vmatprep.subr.mxu0 0.0
    %v65 = vand.u32 %v35, 4294901760
    %66 = vmatpush1.msra.mxu0 %v65
    %67 = vmatprep.subr.mxu0 0.0
    %68 = vmatpush1.msra.mxu0 0.0
    %69 = vmatprep.subr.mxu0 0.0
    %70 = vmatpush1.msra.mxu0 0.0
    %71 = vmatprep.subr.mxu0 0.0
    %72 = vmatpush1.msra.mxu0 0.0
    %73 = vmatprep.subr.mxu0 0.0
    %74 = vmatpush1.msra.mxu0 0.0
    %75 = vmatprep.subr.mxu0 0.0
    %76 = vmatpush1.msra.mxu0 0.0
    %77 = vmatprep.subr.mxu0 0.0
    %78 = vmatpush1.msra.mxu0 0.0
    %79 = vmatprep.subr.mxu0 0.0
    %80 = vmatpush1.msra.mxu0 0.0
    %81 = vmatprep.subr.mxu0 0.0
    %82 = vmatpush1.msra.mxu0 0.0
    %83 = vmatprep.subr.mxu0 0.0
    %84 = vmatpush1.msra.mxu0 0.0
    %85 = vmatprep.subr.mxu0 0.0
    %86 = vmatpush1.msra.mxu0 0.0
    %87 = vmatprep.subr.mxu0 0.0
    %88 = vmatpush1.msra.mxu0 0.0
    %89 = vmatprep.subr.mxu0 0.0
    %90 = vmatpush1.msra.mxu0 0.0
    %91 = vmatprep.subr.mxu0 0.0
    %92 = vmatpush1.msra.mxu0 0.0
    %93 = vmatprep.subr.mxu0 0.0
    %94 = vmatpush1.msra.mxu0 0.0
    %95 = vmatprep.subr.mxu0 0.0
    %96 = vmatpush1.msra.mxu0 0.0
    %97 = vmatprep.subr.mxu0 0.0
    %98 = vmatpush1.msra.mxu0 0.0
    %99 = vmatprep.subr.mxu0 0.0
    %100 = vmatpush1.msra.mxu0 0.0
    %101 = vmatprep.subr.mxu0 0.0
    %102 = vmatpush1.msra.mxu0 0.0
    %103 = vmatprep.subr.mxu0 0.0
    %104 = vmatpush1.msra.mxu0 0.0
    %105 = vmatprep.subr.mxu0 0.0
    %106 = vmatpush1.msra.mxu0 0.0
    %107 = vmatprep.subr.mxu0 0.0
    %108 = vmatpush1.msra.mxu0 0.0
    %109 = vmatprep.subr.mxu0 0.0
    %110 = vmatpush1.msra.mxu0 0.0
    %111 = vmatprep.subr.mxu0 0.0
    %112 = vmatpush1.msra.mxu0 0.0
    %113 = vmatprep.subr.mxu0 0.0
    %114 = vmatpush1.msra.mxu0 0.0
    %115 = vmatprep.mubr.f32.mxu0 0.0
    %v116 = vand.u32 %v38, 4294901760
    %v117 = vsub.f32 %v38, %v116
    %v118 = vand.u32 %v117, 4294901760
    %v119 = vsub.f32 %v117, %v118
    %v120 = vand.u32 %v119, 4294901760
    %121 = vmatmul.mubr.f32.gmra.mrb[0].mxu0 %v120
    %v122 = vpop.f32.mrb[0].mxu0
    %v123 = vadd.f32 0.0, %v122
    %v124 = vpop.f32.mrb[0].mxu0
    %125 = vmatprep.mubr.f32.mxu0 0.0
    %v126 = vand.u32 %v41, 4294901760
    %v127 = vsub.f32 %v41, %v126
    %v128 = vand.u32 %v127, 4294901760
    %v129 = vsub.f32 %v127, %v128
    %v130 = vand.u32 %v129, 4294901760
    %131 = vmatmul.mubr.f32.gmra.mrb[0].mxu0 %v130
    %v132 = vpop.f32.mrb[0].mxu0
    %v133 = vadd.f32 0.0, %v132
    %v134 = vpop.f32.mrb[0].mxu0
    %135 = vdwg.mxu0
    %136 = vmatprep.subr.mxu0 0.0
    %v137 = vand.u32 %v28, 4294901760
    %v138 = vsub.f32 %v28, %v137
    %v139 = vand.u32 %v138, 4294901760
    %v140 = vsub.f32 %v138, %v139
    %v141 = vand.u32 %v140, 4294901760
    %142 = vmatpush1.msra.mxu0 %v141
    %143 = vmatprep.subr.mxu0 0.0
    %v144 = vand.u32 %v29, 4294901760
    %v145 = vsub.f32 %v29, %v144
    %v146 = vand.u32 %v145, 4294901760
    %v147 = vsub.f32 %v145, %v146
    %v148 = vand.u32 %v147, 4294901760
    %149 = vmatpush1.msra.mxu0 %v148
    %150 = vmatprep.subr.mxu0 0.0
    %v151 = vand.u32 %v30, 4294901760
    %v152 = vsub.f32 %v30, %v151
    %v153 = vand.u32 %v152, 4294901760
    %v154 = vsub.f32 %v152, %v153
    %v155 = vand.u32 %v154, 4294901760
    %156 = vmatpush1.msra.mxu0 %v155
    %157 = vmatprep.subr.mxu0 0.0
    %v158 = vand.u32 %v31, 4294901760
    %v159 = vsub.f32 %v31, %v158
    %v160 = vand.u32 %v159, 4294901760
    %v161 = vsub.f32 %v159, %v160
    %v162 = vand.u32 %v161, 4294901760
    %163 = vmatpush1.msra.mxu0 %v162
    %164 = vmatprep.subr.mxu0 0.0
    %v165 = vand.u32 %v32, 4294901760
    %v166 = vsub.f32 %v32, %v165
    %v167 = vand.u32 %v166, 4294901760
    %v168 = vsub.f32 %v166, %v167
    %v169 = vand.u32 %v168, 4294901760
    %170 = vmatpush1.msra.mxu0 %v169
    %171 = vmatprep.subr.mxu0 0.0
    %v172 = vand.u32 %v33, 4294901760
    %v173 = vsub.f32 %v33, %v172
    %v174 = vand.u32 %v173, 4294901760
    %v175 = vsub.f32 %v173, %v174
    %v176 = vand.u32 %v175, 4294901760
    %177 = vmatpush1.msra.mxu0 %v176
    %178 = vmatprep.subr.mxu0 0.0
    %v179 = vand.u32 %v34, 4294901760
    %v180 = vsub.f32 %v34, %v179
    %v181 = vand.u32 %v180, 4294901760
    %v182 = vsub.f32 %v180, %v181
    %v183 = vand.u32 %v182, 4294901760
    %184 = vmatpush1.msra.mxu0 %v183
    %185 = vmatprep.subr.mxu0 0.0
    %v186 = vand.u32 %v35, 4294901760
    %v187 = vsub.f32 %v35, %v186
    %v188 = vand.u32 %v187, 4294901760
    %v189 = vsub.f32 %v187, %v188
    %v190 = vand.u32 %v189, 4294901760
    %191 = vmatpush1.msra.mxu0 %v190
    %192 = vmatprep.subr.mxu0 0.0
    %193 = vmatpush1.msra.mxu0 0.0
    %194 = vmatprep.subr.mxu0 0.0
    %195 = vmatpush1.msra.mxu0 0.0
    %196 = vmatprep.subr.mxu0 0.0
    %197 = vmatpush1.msra.mxu0 0.0
    %198 = vmatprep.subr.mxu0 0.0
    %199 = vmatpush1.msra.mxu0 0.0
    %200 = vmatprep.subr.mxu0 0.0
    %201 = vmatpush1.msra.mxu0 0.0
    %202 = vmatprep.subr.mxu0 0.0
    %203 = vmatpush1.msra.mxu0 0.0
    %204 = vmatprep.subr.mxu0 0.0
    %205 = vmatpush1.msra.mxu0 0.0
    %206 = vmatprep.subr.mxu0 0.0
    %207 = vmatpush1.msra.mxu0 0.0
    %208 = vmatprep.subr.mxu0 0.0
    %209 = vmatpush1.msra.mxu0 0.0
    %210 = vmatprep.subr.mxu0 0.0
    %211 = vmatpush1.msra.mxu0 0.0
    %212 = vmatprep.subr.mxu0 0.0
    %213 = vmatpush1.msra.mxu0 0.0
    %214 = vmatprep.subr.mxu0 0.0
    %215 = vmatpush1.msra.mxu0 0.0
    %216 = vmatprep.subr.mxu0 0.0
    %217 = vmatpush1.msra.mxu0 0.0
    %218 = vmatprep.subr.mxu0 0.0
    %219 = vmatpush1.msra.mxu0 0.0
    %220 = vmatprep.subr.mxu0 0.0
    %221 = vmatpush1.msra.mxu0 0.0
    %222 = vmatprep.subr.mxu0 0.0
    %223 = vmatpush1.msra.mxu0 0.0
    %224 = vmatprep.subr.mxu0 0.0
    %225 = vmatpush1.msra.mxu0 0.0
    %226 = vmatprep.subr.mxu0 0.0
    %227 = vmatpush1.msra.mxu0 0.0
    %228 = vmatprep.subr.mxu0 0.0
    %229 = vmatpush1.msra.mxu0 0.0
    %230 = vmatprep.subr.mxu0 0.0
    %231 = vmatpush1.msra.mxu0 0.0
    %232 = vmatprep.subr.mxu0 0.0
    %233 = vmatpush1.msra.mxu0 0.0
    %234 = vmatprep.subr.mxu0 0.0
    %235 = vmatpush1.msra.mxu0 0.0
    %236 = vmatprep.subr.mxu0 0.0
    %237 = vmatpush1.msra.mxu0 0.0
    %238 = vmatprep.subr.mxu0 0.0
    %239 = vmatpush1.msra.mxu0 0.0
    %240 = vmatprep.mubr.f32.mxu0 0.0
    %v241 = vand.u32 %v38, 4294901760
    %242 = vmatmul.mubr.f32.gmra.mrb[0].mxu0 %v241
    %v243 = vpop.f32.mrb[0].mxu0
    %v244 = vadd.f32 %v123, %v243
    %v245 = vpop.f32.mrb[0].mxu0
    %246 = vmatprep.mubr.f32.mxu0 0.0
    %v247 = vand.u32 %v41, 4294901760
    %248 = vmatmul.mubr.f32.gmra.mrb[0].mxu0 %v247
    %v249 = vpop.f32.mrb[0].mxu0
    %v250 = vadd.f32 %v133, %v249
    %v251 = vpop.f32.mrb[0].mxu0
    %252 = vdwg.mxu0
    %253 = vmatprep.subr.mxu0 0.0
    %v254 = vand.u32 %v28, 4294901760
    %v255 = vsub.f32 %v28, %v254
    %256 = vmatpush1.msra.mxu0 %v255
    %257 = vmatprep.subr.mxu0 0.0
    %v258 = vand.u32 %v29, 4294901760
    %v259 = vsub.f32 %v29, %v258
    %260 = vmatpush1.msra.mxu0 %v259
    %261 = vmatprep.subr.mxu0 0.0
    %v262 = vand.u32 %v30, 4294901760
    %v263 = vsub.f32 %v30, %v262
    %264 = vmatpush1.msra.mxu0 %v263
    %265 = vmatprep.subr.mxu0 0.0
    %v266 = vand.u32 %v31, 4294901760
    %v267 = vsub.f32 %v31, %v266
    %268 = vmatpush1.msra.mxu0 %v267
    %269 = vmatprep.subr.mxu0 0.0
    %v270 = vand.u32 %v32, 4294901760
    %v271 = vsub.f32 %v32, %v270
    %272 = vmatpush1.msra.mxu0 %v271
    %273 = vmatprep.subr.mxu0 0.0
    %v274 = vand.u32 %v33, 4294901760
    %v275 = vsub.f32 %v33, %v274
    %276 = vmatpush1.msra.mxu0 %v275
    %277 = vmatprep.subr.mxu0 0.0
    %v278 = vand.u32 %v34, 4294901760
    %v279 = vsub.f32 %v34, %v278
    %280 = vmatpush1.msra.mxu0 %v279
    %281 = vmatprep.subr.mxu0 0.0
    %v282 = vand.u32 %v35, 4294901760
    %v283 = vsub.f32 %v35, %v282
    %284 = vmatpush1.msra.mxu0 %v283
    %285 = vmatprep.subr.mxu0 0.0
    %286 = vmatpush1.msra.mxu0 0.0
    %287 = vmatprep.subr.mxu0 0.0
    %288 = vmatpush1.msra.mxu0 0.0
    %289 = vmatprep.subr.mxu0 0.0
    %290 = vmatpush1.msra.mxu0 0.0
    %291 = vmatprep.subr.mxu0 0.0
    %292 = vmatpush1.msra.mxu0 0.0
    %293 = vmatprep.subr.mxu0 0.0
    %294 = vmatpush1.msra.mxu0 0.0
    %295 = vmatprep.subr.mxu0 0.0
    %296 = vmatpush1.msra.mxu0 0.0
    %297 = vmatprep.subr.mxu0 0.0
    %298 = vmatpush1.msra.mxu0 0.0
    %299 = vmatprep.subr.mxu0 0.0
    %300 = vmatpush1.msra.mxu0 0.0
    %301 = vmatprep.subr.mxu0 0.0
    %302 = vmatpush1.msra.mxu0 0.0
    %303 = vmatprep.subr.mxu0 0.0
    %304 = vmatpush1.msra.mxu0 0.0
    %305 = vmatprep.subr.mxu0 0.0
    %306 = vmatpush1.msra.mxu0 0.0
    %307 = vmatprep.subr.mxu0 0.0
    %308 = vmatpush1.msra.mxu0 0.0
    %309 = vmatprep.subr.mxu0 0.0
    %310 = vmatpush1.msra.mxu0 0.0
    %311 = vmatprep.subr.mxu0 0.0
    %312 = vmatpush1.msra.mxu0 0.0
    %313 = vmatprep.subr.mxu0 0.0
    %314 = vmatpush1.msra.mxu0 0.0
    %315 = vmatprep.subr.mxu0 0.0
    %316 = vmatpush1.msra.mxu0 0.0
    %317 = vmatprep.subr.mxu0 0.0
    %318 = vmatpush1.msra.mxu0 0.0
    %319 = vmatprep.subr.mxu0 0.0
    %320 = vmatpush1.msra.mxu0 0.0
    %321 = vmatprep.subr.mxu0 0.0
    %322 = vmatpush1.msra.mxu0 0.0
    %323 = vmatprep.subr.mxu0 0.0
    %324 = vmatpush1.msra.mxu0 0.0
    %325 = vmatprep.subr.mxu0 0.0
    %326 = vmatpush1.msra.mxu0 0.0
    %327 = vmatprep.subr.mxu0 0.0
    %328 = vmatpush1.msra.mxu0 0.0
    %329 = vmatprep.subr.mxu0 0.0
    %330 = vmatpush1.msra.mxu0 0.0
    %331 = vmatprep.subr.mxu0 0.0
    %332 = vmatpush1.msra.mxu0 0.0
    %333 = vmatprep.mubr.f32.mxu0 0.0
    %v334 = vand.u32 %v38, 4294901760
    %v335 = vsub.f32 %v38, %v334
    %336 = vmatmul.mubr.f32.gmra.mrb[0].mxu0 %v335
    %v337 = vpop.f32.mrb[0].mxu0
    %v338 = vadd.f32 %v244, %v337
    %v339 = vpop.f32.mrb[0].mxu0
    %340 = vmatprep.mubr.f32.mxu0 0.0
    %v341 = vand.u32 %v41, 4294901760
    %v342 = vsub.f32 %v41, %v341
    %343 = vmatmul.mubr.f32.gmra.mrb[0].mxu0 %v342
    %v344 = vpop.f32.mrb[0].mxu0
    %v345 = vadd.f32 %v250, %v344
    %v346 = vpop.f32.mrb[0].mxu0
    %347 = vdwg.mxu0
    %348 = vmatprep.subr.mxu0 0.0
    %v349 = vand.u32 %v28, 4294901760
    %350 = vmatpush1.msra.mxu0 %v349
    %351 = vmatprep.subr.mxu0 0.0
    %v352 = vand.u32 %v29, 4294901760
    %353 = vmatpush1.msra.mxu0 %v352
    %354 = vmatprep.subr.mxu0 0.0
    %v355 = vand.u32 %v30, 4294901760
    %356 = vmatpush1.msra.mxu0 %v355
    %357 = vmatprep.subr.mxu0 0.0
    %v358 = vand.u32 %v31, 4294901760
    %359 = vmatpush1.msra.mxu0 %v358
    %360 = vmatprep.subr.mxu0 0.0
    %v361 = vand.u32 %v32, 4294901760
    %362 = vmatpush1.msra.mxu0 %v361
    %363 = vmatprep.subr.mxu0 0.0
    %v364 = vand.u32 %v33, 4294901760
    %365 = vmatpush1.msra.mxu0 %v364
    %366 = vmatprep.subr.mxu0 0.0
    %v367 = vand.u32 %v34, 4294901760
    %368 = vmatpush1.msra.mxu0 %v367
    %369 = vmatprep.subr.mxu0 0.0
    %v370 = vand.u32 %v35, 4294901760
    %371 = vmatpush1.msra.mxu0 %v370
    %372 = vmatprep.subr.mxu0 0.0
    %373 = vmatpush1.msra.mxu0 0.0
    %374 = vmatprep.subr.mxu0 0.0
    %375 = vmatpush1.msra.mxu0 0.0
    %376 = vmatprep.subr.mxu0 0.0
    %377 = vmatpush1.msra.mxu0 0.0
    %378 = vmatprep.subr.mxu0 0.0
    %379 = vmatpush1.msra.mxu0 0.0
    %380 = vmatprep.subr.mxu0 0.0
    %381 = vmatpush1.msra.mxu0 0.0
    %382 = vmatprep.subr.mxu0 0.0
    %383 = vmatpush1.msra.mxu0 0.0
    %384 = vmatprep.subr.mxu0 0.0
    %385 = vmatpush1.msra.mxu0 0.0
    %386 = vmatprep.subr.mxu0 0.0
    %387 = vmatpush1.msra.mxu0 0.0
    %388 = vmatprep.subr.mxu0 0.0
    %389 = vmatpush1.msra.mxu0 0.0
    %390 = vmatprep.subr.mxu0 0.0
    %391 = vmatpush1.msra.mxu0 0.0
    %392 = vmatprep.subr.mxu0 0.0
    %393 = vmatpush1.msra.mxu0 0.0
    %394 = vmatprep.subr.mxu0 0.0
    %395 = vmatpush1.msra.mxu0 0.0
    %396 = vmatprep.subr.mxu0 0.0
    %397 = vmatpush1.msra.mxu0 0.0
    %398 = vmatprep.subr.mxu0 0.0
    %399 = vmatpush1.msra.mxu0 0.0
    %400 = vmatprep.subr.mxu0 0.0
    %401 = vmatpush1.msra.mxu0 0.0
    %402 = vmatprep.subr.mxu0 0.0
    %403 = vmatpush1.msra.mxu0 0.0
    %404 = vmatprep.subr.mxu0 0.0
    %405 = vmatpush1.msra.mxu0 0.0
    %406 = vmatprep.subr.mxu0 0.0
    %407 = vmatpush1.msra.mxu0 0.0
    %408 = vmatprep.subr.mxu0 0.0
    %409 = vmatpush1.msra.mxu0 0.0
    %410 = vmatprep.subr.mxu0 0.0
    %411 = vmatpush1.msra.mxu0 0.0
    %412 = vmatprep.subr.mxu0 0.0
    %413 = vmatpush1.msra.mxu0 0.0
    %414 = vmatprep.subr.mxu0 0.0
    %415 = vmatpush1.msra.mxu0 0.0
    %416 = vmatprep.subr.mxu0 0.0
    %417 = vmatpush1.msra.mxu0 0.0
    %418 = vmatprep.subr.mxu0 0.0
    %419 = vmatpush1.msra.mxu0 0.0
    %420 = vmatprep.mubr.f32.mxu0 0.0
    %v421 = vand.u32 %v38, 4294901760
    %v422 = vsub.f32 %v38, %v421
    %v423 = vand.u32 %v422, 4294901760
    %424 = vmatmul.mubr.f32.gmra.mrb[0].mxu0 %v423
    %v425 = vpop.f32.mrb[0].mxu0
    %v426 = vadd.f32 %v338, %v425
    %v427 = vpop.f32.mrb[0].mxu0
    %428 = vmatprep.mubr.f32.mxu0 0.0
    %v429 = vand.u32 %v41, 4294901760
    %v430 = vsub.f32 %v41, %v429
    %v431 = vand.u32 %v430, 4294901760
    %432 = vmatmul.mubr.f32.gmra.mrb[0].mxu0 %v431
    %v433 = vpop.f32.mrb[0].mxu0
    %v434 = vadd.f32 %v345, %v433
    %v435 = vpop.f32.mrb[0].mxu0
    %436 = vdwg.mxu0
    %437 = vmatprep.subr.mxu0 0.0
    %v438 = vand.u32 %v28, 4294901760
    %v439 = vsub.f32 %v28, %v438
    %v440 = vand.u32 %v439, 4294901760
    %441 = vmatpush1.msra.mxu0 %v440
    %442 = vmatprep.subr.mxu0 0.0
    %v443 = vand.u32 %v29, 4294901760
    %v444 = vsub.f32 %v29, %v443
    %v445 = vand.u32 %v444, 4294901760
    %446 = vmatpush1.msra.mxu0 %v445
    %447 = vmatprep.subr.mxu0 0.0
    %v448 = vand.u32 %v30, 4294901760
    %v449 = vsub.f32 %v30, %v448
    %v450 = vand.u32 %v449, 4294901760
    %451 = vmatpush1.msra.mxu0 %v450
    %452 = vmatprep.subr.mxu0 0.0
    %v453 = vand.u32 %v31, 4294901760
    %v454 = vsub.f32 %v31, %v453
    %v455 = vand.u32 %v454, 4294901760
    %456 = vmatpush1.msra.mxu0 %v455
    %457 = vmatprep.subr.mxu0 0.0
    %v458 = vand.u32 %v32, 4294901760
    %v459 = vsub.f32 %v32, %v458
    %v460 = vand.u32 %v459, 4294901760
    %461 = vmatpush1.msra.mxu0 %v460
    %462 = vmatprep.subr.mxu0 0.0
    %v463 = vand.u32 %v33, 4294901760
    %v464 = vsub.f32 %v33, %v463
    %v465 = vand.u32 %v464, 4294901760
    %466 = vmatpush1.msra.mxu0 %v465
    %467 = vmatprep.subr.mxu0 0.0
    %v468 = vand.u32 %v34, 4294901760
    %v469 = vsub.f32 %v34, %v468
    %v470 = vand.u32 %v469, 4294901760
    %471 = vmatpush1.msra.mxu0 %v470
    %472 = vmatprep.subr.mxu0 0.0
    %v473 = vand.u32 %v35, 4294901760
    %v474 = vsub.f32 %v35, %v473
    %v475 = vand.u32 %v474, 4294901760
    %476 = vmatpush1.msra.mxu0 %v475
    %477 = vmatprep.subr.mxu0 0.0
    %478 = vmatpush1.msra.mxu0 0.0
    %479 = vmatprep.subr.mxu0 0.0
    %480 = vmatpush1.msra.mxu0 0.0
    %481 = vmatprep.subr.mxu0 0.0
    %482 = vmatpush1.msra.mxu0 0.0
    %483 = vmatprep.subr.mxu0 0.0
    %484 = vmatpush1.msra.mxu0 0.0
    %485 = vmatprep.subr.mxu0 0.0
    %486 = vmatpush1.msra.mxu0 0.0
    %487 = vmatprep.subr.mxu0 0.0
    %488 = vmatpush1.msra.mxu0 0.0
    %489 = vmatprep.subr.mxu0 0.0
    %490 = vmatpush1.msra.mxu0 0.0
    %491 = vmatprep.subr.mxu0 0.0
    %492 = vmatpush1.msra.mxu0 0.0
    %493 = vmatprep.subr.mxu0 0.0
    %494 = vmatpush1.msra.mxu0 0.0
    %495 = vmatprep.subr.mxu0 0.0
    %496 = vmatpush1.msra.mxu0 0.0
    %497 = vmatprep.subr.mxu0 0.0
    %498 = vmatpush1.msra.mxu0 0.0
    %499 = vmatprep.subr.mxu0 0.0
    %500 = vmatpush1.msra.mxu0 0.0
    %501 = vmatprep.subr.mxu0 0.0
    %502 = vmatpush1.msra.mxu0 0.0
    %503 = vmatprep.subr.mxu0 0.0
    %504 = vmatpush1.msra.mxu0 0.0
    %505 = vmatprep.subr.mxu0 0.0
    %506 = vmatpush1.msra.mxu0 0.0
    %507 = vmatprep.subr.mxu0 0.0
    %508 = vmatpush1.msra.mxu0 0.0
    %509 = vmatprep.subr.mxu0 0.0
    %510 = vmatpush1.msra.mxu0 0.0
    %511 = vmatprep.subr.mxu0 0.0
    %512 = vmatpush1.msra.mxu0 0.0
    %513 = vmatprep.subr.mxu0 0.0
    %514 = vmatpush1.msra.mxu0 0.0
    %515 = vmatprep.subr.mxu0 0.0
    %516 = vmatpush1.msra.mxu0 0.0
    %517 = vmatprep.subr.mxu0 0.0
    %518 = vmatpush1.msra.mxu0 0.0
    %519 = vmatprep.subr.mxu0 0.0
    %520 = vmatpush1.msra.mxu0 0.0
    %521 = vmatprep.subr.mxu0 0.0
    %522 = vmatpush1.msra.mxu0 0.0
    %523 = vmatprep.subr.mxu0 0.0
    %524 = vmatpush1.msra.mxu0 0.0
    %525 = vmatprep.mubr.f32.mxu0 0.0
    %v526 = vand.u32 %v38, 4294901760
    %527 = vmatmul.mubr.f32.gmra.mrb[0].mxu0 %v526
    %v528 = vpop.f32.mrb[0].mxu0
    %v529 = vadd.f32 %v426, %v528
    %v530 = vpop.f32.mrb[0].mxu0
    %531 = vmatprep.mubr.f32.mxu0 0.0
    %v532 = vand.u32 %v41, 4294901760
    %533 = vmatmul.mubr.f32.gmra.mrb[0].mxu0 %v532
    %v534 = vpop.f32.mrb[0].mxu0
    %v535 = vadd.f32 %v434, %v534
    %v536 = vpop.f32.mrb[0].mxu0
    %537 = vdwg.mxu0
    %538 = vmatprep.subr.mxu0 0.0
    %v539 = vand.u32 %v28, 4294901760
    %540 = vmatpush1.msra.mxu0 %v539
    %541 = vmatprep.subr.mxu0 0.0
    %v542 = vand.u32 %v29, 4294901760
    %543 = vmatpush1.msra.mxu0 %v542
    %544 = vmatprep.subr.mxu0 0.0
    %v545 = vand.u32 %v30, 4294901760
    %546 = vmatpush1.msra.mxu0 %v545
    %547 = vmatprep.subr.mxu0 0.0
    %v548 = vand.u32 %v31, 4294901760
    %549 = vmatpush1.msra.mxu0 %v548
    %550 = vmatprep.subr.mxu0 0.0
    %v551 = vand.u32 %v32, 4294901760
    %552 = vmatpush1.msra.mxu0 %v551
    %553 = vmatprep.subr.mxu0 0.0
    %v554 = vand.u32 %v33, 4294901760
    %555 = vmatpush1.msra.mxu0 %v554
    %556 = vmatprep.subr.mxu0 0.0
    %v557 = vand.u32 %v34, 4294901760
    %558 = vmatpush1.msra.mxu0 %v557
    %559 = vmatprep.subr.mxu0 0.0
    %v560 = vand.u32 %v35, 4294901760
    %561 = vmatpush1.msra.mxu0 %v560
    %562 = vmatprep.subr.mxu0 0.0
    %563 = vmatpush1.msra.mxu0 0.0
    %564 = vmatprep.subr.mxu0 0.0
    %565 = vmatpush1.msra.mxu0 0.0
    %566 = vmatprep.subr.mxu0 0.0
    %567 = vmatpush1.msra.mxu0 0.0
    %568 = vmatprep.subr.mxu0 0.0
    %569 = vmatpush1.msra.mxu0 0.0
    %570 = vmatprep.subr.mxu0 0.0
    %571 = vmatpush1.msra.mxu0 0.0
    %572 = vmatprep.subr.mxu0 0.0
    %573 = vmatpush1.msra.mxu0 0.0
    %574 = vmatprep.subr.mxu0 0.0
    %575 = vmatpush1.msra.mxu0 0.0
    %576 = vmatprep.subr.mxu0 0.0
    %577 = vmatpush1.msra.mxu0 0.0
    %578 = vmatprep.subr.mxu0 0.0
    %579 = vmatpush1.msra.mxu0 0.0
    %580 = vmatprep.subr.mxu0 0.0
    %581 = vmatpush1.msra.mxu0 0.0
    %582 = vmatprep.subr.mxu0 0.0
    %583 = vmatpush1.msra.mxu0 0.0
    %584 = vmatprep.subr.mxu0 0.0
    %585 = vmatpush1.msra.mxu0 0.0
    %586 = vmatprep.subr.mxu0 0.0
    %587 = vmatpush1.msra.mxu0 0.0
    %588 = vmatprep.subr.mxu0 0.0
    %589 = vmatpush1.msra.mxu0 0.0
    %590 = vmatprep.subr.mxu0 0.0
    %591 = vmatpush1.msra.mxu0 0.0
    %592 = vmatprep.subr.mxu0 0.0
    %593 = vmatpush1.msra.mxu0 0.0
    %594 = vmatprep.subr.mxu0 0.0
    %595 = vmatpush1.msra.mxu0 0.0
    %596 = vmatprep.subr.mxu0 0.0
    %597 = vmatpush1.msra.mxu0 0.0
    %598 = vmatprep.subr.mxu0 0.0
    %599 = vmatpush1.msra.mxu0 0.0
    %600 = vmatprep.subr.mxu0 0.0
    %601 = vmatpush1.msra.mxu0 0.0
    %602 = vmatprep.subr.mxu0 0.0
    %603 = vmatpush1.msra.mxu0 0.0
    %604 = vmatprep.subr.mxu0 0.0
    %605 = vmatpush1.msra.mxu0 0.0
    %606 = vmatprep.subr.mxu0 0.0
    %607 = vmatpush1.msra.mxu0 0.0
    %608 = vmatprep.subr.mxu0 0.0
    %609 = vmatpush1.msra.mxu0 0.0
    %610 = vmatprep.mubr.f32.mxu0 0.0
    %v611 = vand.u32 %v38, 4294901760
    %612 = vmatmul.mubr.f32.gmra.mrb[0].mxu0 %v611
    %v613 = vpop.f32.mrb[0].mxu0
    %v614 = vadd.f32 %v529, %v613
    %v615 = vpop.f32.mrb[0].mxu0
    %616 = vmatprep.mubr.f32.mxu0 0.0
    %v617 = vand.u32 %v41, 4294901760
    %618 = vmatmul.mubr.f32.gmra.mrb[0].mxu0 %v617
    %v619 = vpop.f32.mrb[0].mxu0
    %v620 = vadd.f32 %v535, %v619
    %v621 = vpop.f32.mrb[0].mxu0
    %622 = vdwg.mxu0
    %vm623 = vcmask 261120
    %624 = vst.msk [vmem:[#allocation2] sm:$0xff] %vm623, %v614
    %625 = vst.msk [vmem:[#allocation2 + $0x8] sm:$0xff] %vm623, %v620
    // Predicated region
    $region10: #{tpu_custom_call.1} parent=1 // pred_check
      _
    $region11: #{tpu_custom_call.1} parent=1 // pred_check_branch
      %627 = sbr.rel (0) target = $region13
    $region12: #{tpu_custom_call.1} parent=1 // pred_region
      %s629 = ssub.s32 256, 256
      %630 = vsyncadd [#allocation3], %s629
      %s631 = sshll.u32 [#allocation2], 4
      %s632 = int_to_ptr.vmem [resolvable:$true] %s631
      %637 = dma.vmem_to_hbm [thread:$0]  %s632, 256, %s2, [#allocation3], 128, 128, 8
    $region13: #{tpu_custom_call.1} parent=1 // pred_fallthru
      _
    // Predicated region
    $region14: #{tpu_custom_call.1} parent=1 // pred_check
      _
    $region15: #{tpu_custom_call.1} parent=1 // pred_check_branch
      %639 = sbr.rel (0) target = $region17
    $region16: #{tpu_custom_call.1} parent=1 // pred_region
      %640 = dma.done [#allocation3], 256
    $region17: #{tpu_custom_call.1} parent=1 // pred_fallthru
      _
    %641 = vsyncpa [#allocation3], 1

</llo_original>
